<compile_context>
chip_gen: v6e
topology: v6e:2x2x1
jax: 0.10.0
libtpu: 0.0.40
codegen_flags: <defaults>
</compile_context>

<pallas_src>
import functools

import jax
import jax.numpy as jnp
from jax import lax
from jax.experimental import pallas as pl
from jax.experimental.pallas import tpu as pltpu


# ----------------------------------------------------------------------------
# Kernel: shared + routed experts; f32 scratch accumulator; out in x.dtype.
# ----------------------------------------------------------------------------
def _moe_kernel(ids_ref,                  # SMEM (nT, E+1) int32  (prefetch)
                cnt_ref,                  # SMEM (nT,)    int32  (prefetch)
                x_ref,                    # (TM, H)        compute dtype
                gu_ref,                   # (1, 2, H, TF)  compute dtype
                down_ref,                 # (1, TF, H)     compute dtype
                cw_ref,                   # (1, TM, 1)     f32 combine weights
                o_ref,                    # (TM, H)        out dtype
                acc_ref):                 # (TM, H)        f32 scratch
    i = pl.program_id(0)                  # token tile
    e = pl.program_id(1)                  # compacted expert slot
    f = pl.program_id(2)                  # F tile

    # First step for this token tile: zero the f32 accumulator.
    @pl.when(jnp.logical_and(e == 0, f == 0))
    def _():
        acc_ref[...] = jnp.zeros_like(acc_ref)

    # Only the first cnt[i] compacted expert slots are active for this tile.
    # Inactive slots already had their weight DMAs deduped away (index maps
    # repeat the previous block); here we also skip all compute.
    @pl.when(e < cnt_ref[i])
    def _():
        x = x_ref[...]
        g = jnp.dot(x, gu_ref[0, 0], preferred_element_type=jnp.float32)
        u = jnp.dot(x, gu_ref[0, 1], preferred_element_type=jnp.float32)
        # Combine weight applied on the (TM, TF) hidden, in f32, before cast.
        h = (cw_ref[0] * (jax.nn.silu(g) * u)).astype(down_ref.dtype)
        acc_ref[...] += jnp.dot(h, down_ref[0],
                                preferred_element_type=jnp.float32)

    # Last step for this token tile: emit the output block in x.dtype.
    @pl.when(jnp.logical_and(e == pl.num_programs(1) - 1,
                             f == pl.num_programs(2) - 1))
    def _():
        o_ref[...] = acc_ref[...].astype(o_ref.dtype)


# ----------------------------------------------------------------------------
# Generation-aware tile selection (tm, tf) + scoped VMEM limit.
# ----------------------------------------------------------------------------
def _choose_tiles(T, H, Fmax, w_itemsize, out_itemsize):
    try:
        vmem_cap = int(pltpu.get_tpu_info().vmem_capacity_bytes)
    except Exception:
        vmem_cap = 64 * 1024 * 1024          # conservative (v7x per-TC)
    vmem_limit = int(min(vmem_cap - vmem_cap // 8, 100 * 1024 * 1024))
    budget = (vmem_limit * 9) // 10          # headroom for compiler internals

    def footprint(tm, tf):
        return (2 * tm * H * w_itemsize          # x block (double-buffered)
                + 2 * 2 * H * tf * w_itemsize    # fused gate|up weight block
                + 2 * tf * H * w_itemsize        # down weight block
                + 2 * tm * 4                     # combine-weight block
                + 2 * tm * H * out_itemsize      # output block
                + tm * H * 4)                    # f32 accumulator scratch

    tm_cands = [c for c in (1024, 512, 256, 128, 64, 32, 16, 8) if c <= T] or [T]
    if Fmax >= 128 and Fmax % 128 == 0:
        tf_cands = [c for c in (1024, 512, 256, 128) if Fmax % c == 0]
    else:
        tf_cands = [Fmax]

    for tm in tm_cands:                       # prefer big token tiles (roofline)
        for tf in tf_cands:
            if footprint(tm, tf) <= budget:
                return tm, tf, vmem_limit
    return tm_cands[-1], tf_cands[-1], vmem_limit


# ----------------------------------------------------------------------------
# One-time weight staging (call at init, reuse every forward).
# ----------------------------------------------------------------------------
def prepare_moe_weights(params, compute_dtype=jnp.bfloat16):
    E, H, F = params["expert_gate"].shape
    Fs = params["shared_gate"].shape[1]
    Fmax = max(F, Fs)
    if Fmax >= 128:
        Fmax = ((Fmax + 127) // 128) * 128   # lane-aligned F (zero pad: exact)

    def pad_f(w, axis):
        if w.shape[axis] == Fmax:
            return w
        pad = [(0, 0)] * w.ndim
        pad[axis] = (0, Fmax - w.shape[axis])
        return jnp.pad(w, pad)

    gate = jnp.concatenate([pad_f(params["shared_gate"], 1)[None],
                            pad_f(params["expert_gate"], 2)], axis=0)
    up = jnp.concatenate([pad_f(params["shared_up"], 1)[None],
                          pad_f(params["expert_up"], 2)], axis=0)
    down = jnp.concatenate([pad_f(params["shared_down"], 0)[None],
                            pad_f(params["expert_down"], 1)], axis=0)
    gu = jnp.stack([gate, up], axis=1).astype(compute_dtype)  # (E+1, 2, H, F)
    return {
        "router": params["router"].astype(jnp.float32),        # (H, E)
        "gu": gu,                                               # (E+1, 2, H, F)
        "down": down.astype(compute_dtype),                     # (E+1, F, H)
    }


# ----------------------------------------------------------------------------
# Pallas call.
# ----------------------------------------------------------------------------
def _moe_pallas(x_c, gu, down, cw_t, ids, count, tm, tf, out_dtype, vmem_limit):
    T_pad, H = x_c.shape
    E1 = gu.shape[0]
    Fmax = gu.shape[-1]
    nT = T_pad // tm
    nF = Fmax // tf

    # Inactive (tile, expert-slot) steps map onto the block fetched at the
    # immediately preceding grid step (same expert id, f pinned to nF-1), so
    # the pipeliner dedups the copy and the skipped experts' weights never
    # leave HBM.
    def gu_map(i, e, f, ids_ref, cnt_ref):
        act = e < cnt_ref[i]
        return (ids_ref[i, e], 0, 0, jnp.where(act, f, nF - 1))

    def down_map(i, e, f, ids_ref, cnt_ref):
        act = e < cnt_ref[i]
        return (ids_ref[i, e], jnp.where(act, f, nF - 1), 0)

    def cw_map(i, e, f, ids_ref, cnt_ref):
        return (ids_ref[i, e], i, 0)

    return pl.pallas_call(
        _moe_kernel,
        out_shape=jax.ShapeDtypeStruct((T_pad, H), out_dtype),
        grid_spec=pltpu.PrefetchScalarGridSpec(
            num_scalar_prefetch=2,
            grid=(nT, E1, nF),
            in_specs=[
                pl.BlockSpec((tm, H), lambda i, e, f, ids, cnt: (i, 0)),   # x
                pl.BlockSpec((1, 2, H, tf), gu_map),                       # gate|up
                pl.BlockSpec((1, tf, H), down_map),                        # down
                pl.BlockSpec((1, tm, 1), cw_map),                          # combine
            ],
            out_specs=pl.BlockSpec((tm, H), lambda i, e, f, ids, cnt: (i, 0)),
            scratch_shapes=[pltpu.VMEM((tm, H), jnp.float32)],
        ),
        compiler_params=pltpu.CompilerParams(
            dimension_semantics=("parallel", "arbitrary", "arbitrary"),
            vmem_limit_bytes=vmem_limit),
    )(ids, count, x_c, gu, down, cw_t)


# ----------------------------------------------------------------------------
# Forward (jitted; weights pre-staged by prepare_moe_weights).
# ----------------------------------------------------------------------------
@functools.partial(jax.jit, static_argnames=("num_experts_per_token",))
def tiled_memory_moe(x, prepared, num_experts_per_token):
    B, S, H = x.shape
    T = B * S
    gu, down, router = prepared["gu"], prepared["down"], prepared["router"]
    E1 = gu.shape[0]
    E = E1 - 1
    Fmax = gu.shape[-1]
    cdtype = gu.dtype
    out_dtype = x.dtype

    x_flat = x.reshape(T, H)

    # --- router (tiny GEMM + softmax + top-k) in plain XLA, f32 ---
    logits = jnp.dot(x_flat.astype(jnp.float32), router)
    probs = jax.nn.softmax(logits, axis=-1)
    topk_probs, topk_idx = lax.top_k(probs, num_experts_per_token)

    # Per-token combine weights via scatter-add (no (T, K, E) one-hot).
    routed_cw = jnp.zeros((T, E), jnp.float32).at[
        jnp.arange(T)[:, None], topk_idx].add(topk_probs)
    # Prepend the shared expert with constant weight 1.0 -> (T, E+1).
    cw_all = jnp.concatenate([jnp.ones((T, 1), jnp.float32), routed_cw], axis=1)

    # --- generation-aware tiling + token padding to a tile multiple ---
    tm, tf, vmem_limit = _choose_tiles(
        T, H, Fmax, jnp.dtype(cdtype).itemsize, jnp.dtype(out_dtype).itemsize)
    T_pad = ((T + tm - 1) // tm) * tm
    nT = T_pad // tm
    if T_pad != T:
        x_flat = jnp.pad(x_flat, ((0, T_pad - T), (0, 0)))
        cw_all = jnp.pad(cw_all, ((0, T_pad - T), (0, 0)))

    # --- per-tile compacted active-expert table (SMEM scalar prefetch) ---
    active = cw_all.reshape(nT, tm, E1).max(axis=1) > 0.0          # (nT, E+1)
    count = active.sum(axis=1).astype(jnp.int32)                   # (nT,)
    e_idx = jnp.arange(E1, dtype=jnp.int32)[None, :]
    order = jnp.argsort(jnp.where(active, e_idx, E1 + e_idx),
                        axis=1).astype(jnp.int32)                  # active first
    last = jnp.take_along_axis(order, jnp.maximum(count - 1, 0)[:, None], axis=1)
    ids = jnp.where(e_idx < count[:, None], order, last)           # (nT, E+1)

    cw_t = jnp.transpose(cw_all)[:, :, None]                       # (E+1, T_pad, 1)

    out = _moe_pallas(x_flat.astype(cdtype), gu, down, cw_t, ids, count,
                      tm, tf, out_dtype, vmem_limit)
    return out[:T].reshape(B, S, H)


# ----------------------------------------------------------------------------
# Pure-JAX reference for the correctness check.
# ----------------------------------------------------------------------------
def reference_moe(x, params, num_experts_per_token):
    B, S, H = x.shape
    xf = x.reshape(-1, H)
    shared = (jax.nn.silu(xf @ params["shared_gate"]) *
              (xf @ params["shared_up"])) @ params["shared_down"]
    probs = jax.nn.softmax(xf @ params["router"], axis=-1)
    topk_probs, topk_idx = lax.top_k(probs, num_experts_per_token)
    E = params["router"].shape[1]
    routed = jnp.zeros_like(xf)
    for e in range(E):
        w = jnp.sum(topk_probs * (topk_idx == e), axis=-1, keepdims=True)
        y = (jax.nn.silu(xf @ params["expert_gate"][e]) *
             (xf @ params["expert_up"][e])) @ params["expert_down"][e]
        routed = routed + w * y
    return (routed + shared).reshape(B, S, H)


if __name__ == "__main__":
    def make_params(key, H, F, E):
        ks = jax.random.split(key, 7)
        s = 1.0 / (H ** 0.5)
        return {
            "router": jax.random.normal(ks[0], (H, E), jnp.float32) * s,
            "shared_gate": jax.random.normal(ks[1], (H, F), jnp.float32) * s,
            "shared_up": jax.random.normal(ks[2], (H, F), jnp.float32) * s,
            "shared_down": jax.random.normal(ks[3], (F, H), jnp.float32) * s,
            "expert_gate": jax.random.normal(ks[4], (E, H, F), jnp.float32) * s,
            "expert_up": jax.random.normal(ks[5], (E, H, F), jnp.float32) * s,
            "expert_down": jax.random.normal(ks[6], (E, F, H), jnp.float32) * s,
        }

    key = jax.random.PRNGKey(0)
    k1, k2, k3, k4 = jax.random.split(key, 4)

    # Config 1: small shapes, all experts likely active in the single tile.
    B, S, H, F, E, K = 2, 8, 32, 64, 4, 2
    params = make_params(k1, H, F, E)
    x = jax.random.normal(k2, (B, S, H), jnp.float32)
    prepared = prepare_moe_weights(params)             # one-time staging (bf16)
    out = jax.block_until_ready(tiled_memory_moe(x, prepared, K))
    ref = reference_moe(x, params, K)
    assert out.shape == (B, S, H)
    assert jnp.allclose(out, ref, rtol=4e-2, atol=4e-2), (
        float(jnp.max(jnp.abs(out - ref))))

    # Config 2: many experts, top-1 routing -> exercises the inactive-expert
    # compaction / DMA-dedup / compute-skip path.
    B2, S2, H2, F2, E2, K2 = 2, 8, 32, 64, 16, 1
    params2 = make_params(k3, H2, F2, E2)
    x2 = jax.random.normal(k4, (B2, S2, H2), jnp.float32)
    prepared2 = prepare_moe_weights(params2)
    out2 = jax.block_until_ready(tiled_memory_moe(x2, prepared2, K2))
    ref2 = reference_moe(x2, params2, K2)
    assert jnp.allclose(out2, ref2, rtol=4e-2, atol=4e-2), (
        float(jnp.max(jnp.abs(out2 - ref2))))

    print("KERNEL_OK")
</pallas_src>

<mosaic_0001>
module attributes {stable_mosaic.version = 11 : i64} {
  func.func private @main(%arg0: i32) attributes {dimension_semantics = [#tpu.dimension_semantics<core_parallel>], iteration_bounds = array<i64: 2>, tpu.core_type = #tpu.core_type<sc_scalar_subcore>, window_params = []} {
    return
  }
}

module attributes {stable_mosaic.version = 11 : i64} {
  func.func private @main(%arg0: i32) attributes {dimension_semantics = [#tpu.dimension_semantics<core_parallel>], iteration_bounds = array<i64: 2>, tpu.core_type = #tpu.core_type<sc_scalar_subcore>, window_params = []} {
    return
  }
}

module attributes {stable_mosaic.version = 11 : i64} {
  func.func @_moe_kernel(%arg0: i32, %arg1: i32, %arg2: i32, %arg3: memref<1x5xi32, #tpu.memory_space<smem>>, %arg4: memref<1xi32, #tpu.memory_space<smem>>, %arg5: memref<16x32xbf16, #tpu.memory_space<vmem>>, %arg6: memref<1x2x32x64xbf16, #tpu.memory_space<vmem>>, %arg7: memref<1x64x32xbf16, #tpu.memory_space<vmem>>, %arg8: memref<1x16x1xf32, #tpu.memory_space<vmem>>, %arg9: memref<16x32xf32, #tpu.memory_space<vmem>>, %arg10: memref<16x32xf32, #tpu.memory_space<vmem>>) attributes {dimension_semantics = [#tpu.dimension_semantics<parallel>, #tpu.dimension_semantics<arbitrary>, #tpu.dimension_semantics<arbitrary>], iteration_bounds = array<i64: 1, 5, 1>, scalar_prefetch = 2 : i64, scratch_operands = 1 : i64, tpu.core_type = #tpu.core_type<tc>, window_params = [{transform_indices = @transform_0, window_bounds = array<i64: 16, 32>}, {transform_indices = @transform_1, window_bounds = array<i64: 1, 2, 32, 64>}, {transform_indices = @transform_2, window_bounds = array<i64: 1, 64, 32>}, {transform_indices = @transform_3, window_bounds = array<i64: 1, 16, 1>}, {transform_indices = @transform_4, window_bounds = array<i64: 16, 32>}]} {
    %c0_i32 = arith.constant 0 : i32
    %0 = arith.cmpi eq, %arg1, %c0_i32 : i32
    %c0_i32_0 = arith.constant 0 : i32
    %1 = arith.cmpi eq, %arg2, %c0_i32_0 : i32
    %2 = arith.andi %0, %1 : i1
    %3 = arith.extui %2 : i1 to i32
    %c0_i32_1 = arith.constant 0 : i32
    %4 = arith.cmpi ne, %3, %c0_i32_1 : i32
    scf.if %4 {
      %cst = arith.constant 0.000000e+00 : f32
      %15 = vector.broadcast %cst : f32 to vector<16x32xf32>
      %c0 = arith.constant 0 : index
      %c0_5 = arith.constant 0 : index
      %16 = vector.load %arg10[%c0, %c0_5] : memref<16x32xf32, #tpu.memory_space<vmem>>, vector<16x32xf32>
      tpu.vector_store %arg10[%c0, %c0_5], %15 {strides = array<i32>} : memref<16x32xf32, #tpu.memory_space<vmem>>, vector<16x32xf32>,
    } else {
    }
    %5 = arith.index_cast %arg0 : i32 to index
    %6 = memref.load %arg4[%5] : memref<1xi32, #tpu.memory_space<smem>>
    %7 = arith.cmpi slt, %arg1, %6 : i32
    %8 = arith.extui %7 : i1 to i32
    %c0_i32_2 = arith.constant 0 : i32
    %9 = arith.cmpi ne, %8, %c0_i32_2 : i32
    scf.if %9 {
      %c0 = arith.constant 0 : index
      %c0_5 = arith.constant 0 : index
      %15 = vector.load %arg5[%c0, %c0_5] : memref<16x32xbf16, #tpu.memory_space<vmem>>, vector<16x32xbf16>
      %c0_6 = arith.constant 0 : index
      %c0_7 = arith.constant 0 : index
      %c0_8 = arith.constant 0 : index
      %c0_9 = arith.constant 0 : index
      %16 = vector.load %arg6[%c0_6, %c0_7, %c0_8, %c0_9] : memref<1x2x32x64xbf16, #tpu.memory_space<vmem>>, vector<1x1x32x64xbf16>
      %17 = vector.shape_cast %16 : vector<1x1x32x64xbf16> to vector<32x64xbf16>
      %cst = arith.constant dense<0.000000e+00> : vector<16x64xf32>
      %18 = tpu.matmul %15, %17, %cst {dimension_numbers = #tpu.dot_dimension_numbers<[1], [0], [0], [1], [0, 0, 1, 1], [], []>} : vector<16x32xbf16>, vector<32x64xbf16>, vector<16x64xf32> -> vector<16x64xf32>
      %c0_10 = arith.constant 0 : index
      %c1 = arith.constant 1 : index
      %c0_11 = arith.constant 0 : index
      %c0_12 = arith.constant 0 : index
      %19 = vector.load %arg6[%c0_10, %c1, %c0_11, %c0_12] : memref<1x2x32x64xbf16, #tpu.memory_space<vmem>>, vector<1x1x32x64xbf16>
      %20 = vector.shape_cast %19 : vector<1x1x32x64xbf16> to vector<32x64xbf16>
      %cst_13 = arith.constant dense<0.000000e+00> : vector<16x64xf32>
      %21 = tpu.matmul %15, %20, %cst_13 {dimension_numbers = #tpu.dot_dimension_numbers<[1], [0], [0], [1], [0, 0, 1, 1], [], []>} : vector<16x32xbf16>, vector<32x64xbf16>, vector<16x64xf32> -> vector<16x64xf32>
      %c0_14 = arith.constant 0 : index
      %c0_15 = arith.constant 0 : index
      %c0_16 = arith.constant 0 : index
      %22 = vector.load %arg8[%c0_14, %c0_15, %c0_16] : memref<1x16x1xf32, #tpu.memory_space<vmem>>, vector<1x16x1xf32>
      %23 = vector.shape_cast %22 : vector<1x16x1xf32> to vector<16x1xf32>
      %24 = arith.negf %18 : vector<16x64xf32>
      %25 = math.exp %24 : vector<16x64xf32>
      %cst_17 = arith.constant 1.000000e+00 : f32
      %26 = vector.broadcast %cst_17 : f32 to vector<16x64xf32>
      %27 = arith.addf %26, %25 : vector<16x64xf32>
      %28 = arith.divf %26, %27 : vector<16x64xf32>
      %29 = arith.mulf %18, %28 : vector<16x64xf32>
      %30 = arith.mulf %29, %21 : vector<16x64xf32>
      %31 = vector.broadcast %23 : vector<16x1xf32> to vector<16x64xf32>
      %32 = arith.mulf %31, %30 : vector<16x64xf32>
      %33 = arith.truncf %32 : vector<16x64xf32> to vector<16x64xbf16>
      %c0_18 = arith.constant 0 : index
      %c0_19 = arith.constant 0 : index
      %34 = vector.load %arg10[%c0_18, %c0_19] : memref<16x32xf32, #tpu.memory_space<vmem>>, vector<16x32xf32>
      %c0_20 = arith.constant 0 : index
      %c0_21 = arith.constant 0 : index
      %c0_22 = arith.constant 0 : index
      %35 = vector.load %arg7[%c0_20, %c0_21, %c0_22] : memref<1x64x32xbf16, #tpu.memory_space<vmem>>, vector<1x64x32xbf16>
      %36 = vector.shape_cast %35 : vector<1x64x32xbf16> to vector<64x32xbf16>
      %cst_23 = arith.constant dense<0.000000e+00> : vector<16x32xf32>
      %37 = tpu.matmul %33, %36, %cst_23 {dimension_numbers = #tpu.dot_dimension_numbers<[1], [0], [0], [1], [0, 0, 1, 1], [], []>} : vector<16x64xbf16>, vector<64x32xbf16>, vector<16x32xf32> -> vector<16x32xf32>
      %38 = arith.addf %34, %37 : vector<16x32xf32>
      %c0_24 = arith.constant 0 : index
      %c0_25 = arith.constant 0 : index
      %39 = vector.load %arg10[%c0_24, %c0_25] : memref<16x32xf32, #tpu.memory_space<vmem>>, vector<16x32xf32>
      tpu.vector_store %arg10[%c0_24, %c0_25], %38 {strides = array<i32>} : memref<16x32xf32, #tpu.memory_space<vmem>>, vector<16x32xf32>,
    } else {
    }
    %c4_i32 = arith.constant 4 : i32
    %10 = arith.cmpi eq, %arg1, %c4_i32 : i32
    %c0_i32_3 = arith.constant 0 : i32
    %11 = arith.cmpi eq, %arg2, %c0_i32_3 : i32
    %12 = arith.andi %10, %11 : i1
    %13 = arith.extui %12 : i1 to i32
    %c0_i32_4 = arith.constant 0 : i32
    %14 = arith.cmpi ne, %13, %c0_i32_4 : i32
    scf.if %14 {
      %c0 = arith.constant 0 : index
      %c0_5 = arith.constant 0 : index
      %15 = vector.load %arg10[%c0, %c0_5] : memref<16x32xf32, #tpu.memory_space<vmem>>, vector<16x32xf32>
      %c0_6 = arith.constant 0 : index
      %c0_7 = arith.constant 0 : index
      %16 = vector.load %arg9[%c0_6, %c0_7] : memref<16x32xf32, #tpu.memory_space<vmem>>, vector<16x32xf32>
      tpu.vector_store %arg9[%c0_6, %c0_7], %15 {strides = array<i32>} : memref<16x32xf32, #tpu.memory_space<vmem>>, vector<16x32xf32>,
    } else {
    }
    return
  }
  func.func @transform_0(%arg0: i32, %arg1: i32, %arg2: i32, %arg3: memref<1x5xi32, #tpu.memory_space<smem>>, %arg4: memref<1xi32, #tpu.memory_space<smem>>) -> (i32, i32) {
    %c0_i32 = arith.constant 0 : i32
    %c0_i32_0 = arith.constant 0 : i32
    return %arg0, %c0_i32 : i32, i32
  }
  func.func @transform_1(%arg0: i32, %arg1: i32, %arg2: i32, %arg3: memref<1x5xi32, #tpu.memory_space<smem>>, %arg4: memref<1xi32, #tpu.memory_space<smem>>) -> (i32, i32, i32, i32) {
    %0 = arith.index_cast %arg0 : i32 to index
    %1 = memref.load %arg4[%0] : memref<1xi32, #tpu.memory_space<smem>>
    %2 = arith.cmpi slt, %arg1, %1 : i32
    %3 = arith.index_cast %arg0 : i32 to index
    %4 = arith.index_cast %arg1 : i32 to index
    %5 = memref.load %arg3[%3, %4] : memref<1x5xi32, #tpu.memory_space<smem>>
    %c0_i32 = arith.constant 0 : i32
    %6 = arith.select %2, %arg2, %c0_i32 : i32
    %c0_i32_0 = arith.constant 0 : i32
    %c0_i32_1 = arith.constant 0 : i32
    %c0_i32_2 = arith.constant 0 : i32
    return %5, %c0_i32_0, %c0_i32_1, %6 : i32, i32, i32, i32
  }
  func.func @transform_2(%arg0: i32, %arg1: i32, %arg2: i32, %arg3: memref<1x5xi32, #tpu.memory_space<smem>>, %arg4: memref<1xi32, #tpu.memory_space<smem>>) -> (i32, i32, i32) {
    %0 = arith.index_cast %arg0 : i32 to index
    %1 = memref.load %arg4[%0] : memref<1xi32, #tpu.memory_space<smem>>
    %2 = arith.cmpi slt, %arg1, %1 : i32
    %3 = arith.index_cast %arg0 : i32 to index
    %4 = arith.index_cast %arg1 : i32 to index
    %5 = memref.load %arg3[%3, %4] : memref<1x5xi32, #tpu.memory_space<smem>>
    %c0_i32 = arith.constant 0 : i32
    %6 = arith.select %2, %arg2, %c0_i32 : i32
    %c0_i32_0 = arith.constant 0 : i32
    %c0_i32_1 = arith.constant 0 : i32
    return %5, %6, %c0_i32_0 : i32, i32, i32
  }
  func.func @transform_3(%arg0: i32, %arg1: i32, %arg2: i32, %arg3: memref<1x5xi32, #tpu.memory_space<smem>>, %arg4: memref<1xi32, #tpu.memory_space<smem>>) -> (i32, i32, i32) {
    %0 = arith.index_cast %arg0 : i32 to index
    %1 = arith.index_cast %arg1 : i32 to index
    %2 = memref.load %arg3[%0, %1] : memref<1x5xi32, #tpu.memory_space<smem>>
    %c0_i32 = arith.constant 0 : i32
    %c0_i32_0 = arith.constant 0 : i32
    return %2, %arg0, %c0_i32 : i32, i32, i32
  }
  func.func @transform_4(%arg0: i32, %arg1: i32, %arg2: i32, %arg3: memref<1x5xi32, #tpu.memory_space<smem>>, %arg4: memref<1xi32, #tpu.memory_space<smem>>) -> (i32, i32) {
    %c0_i32 = arith.constant 0 : i32
    %c0_i32_0 = arith.constant 0 : i32
    return %arg0, %c0_i32 : i32, i32
  }
}

</mosaic_0001>

<llo_original>
// kernel: tiled_memory_moe.1
$region0: #{tiled_memory_moe.1}
  #allocation0 [shape = 'u32[]', space=smem, size = 0x4, offset = 0x4, fixed_abs, tag = 'smem constant byte address 0x4 - core index']
  #allocation1 [shape = 'u32[144,128]{1,0:T(1,128)}', space=vmem, size = 0x12000, scoped, tag = 'internal scratch']
  #allocation2 [shape = 'f32[16,32]{1,0:T(8,128)}', space=vmem, size = 0x2000, scoped, tag = 'scratch operand']
  #allocation3 [shape = 's32[1]{0}', space=sflag, size = 0x4, scoped, tag = 'scoped memory for tiled_memory_moe.1']
  #allocation4 [shape = 'u8[512]{0}', space=smem, size = 0x200, scoped, tag = 'prefetched SMEM operand 0']
  #allocation5 [shape = 's32[1]{0:T(128)S(6)}', space=smem, size = 0x200, scoped, tag = 'prefetched SMEM operand 1']
  %s0 = inlined_call_operand.vmem [shape: s32[1,5], index: 0, kind: input, shape index: {}]
  %s1 = inlined_call_operand.<no memory space> [shape: s32[1], index: 1, kind: input, shape index: {}]
  %s2 = inlined_call_operand.vmem [shape: bf16[16,32], index: 2, kind: input, shape index: {}]
  %s3 = inlined_call_operand.vmem [shape: bf16[5,2,32,64], index: 3, kind: input, shape index: {}]
  %s4 = inlined_call_operand.vmem [shape: bf16[5,64,32], index: 4, kind: input, shape index: {}]
  %s5 = inlined_call_operand.vmem [shape: f32[5,16,1], index: 5, kind: input, shape index: {}]
  %s6 = inlined_call_operand.hbm [shape: f32[16,32], index: 6, kind: output, shape index: {}]
  %s7 = sld [smem:[#allocation0]]
  $region61: #{tiled_memory_moe.1} parent=0
    _
  %s9 = ssub.s32 1, %s7
  %s10 = scalar_select 0, %s9, %s7
  %s11 = sshll.u32 %s0, 4
  %s12 = int_to_ptr.vmem [resolvable:$true] %s11
  %14 = dma.vmem_to_smem %s12, 16, [#allocation4], [#allocation3]
  %15 = sst [smem:[#allocation5]] %s1
  %16 = dma.done [#allocation3], 16
  %17 = sfence
  $region1: #{tiled_memory_moe.1} parent=0
    #allocation6 [shape = 'u8[8192]{0}', space=vmem, size = 0x2000, scoped, tag = 'output window, operand 0, single buffered']
    #allocation7 [shape = 's32[2]{0}', space=sflag, size = 0x8, scoped, tag = 'scoped memory for tiled_memory_moe.1']
    %18 = vsyncpa [#allocation7], 0
    loop: start=0, step=1, limit=7
    $region2: #{tiled_memory_moe.1} parent=1 // loop_pre_header
      _
    $region3: #{tiled_memory_moe.1} parent=1 // loop_header
      %s20 = sphi 0, %s24
      %p21 = scmp.ge.s32.totalorder %s20, 7
      %s27 = sphi 0, %s46
      %s28 = sphi 0, %s42
      %s29 = sphi 0, %s38
      %s30 = sphi 0, %s27
      %s31 = sphi 0, %s28
      %s32 = sphi 0, %s29
      %s33 = sphi 0, %s30
      %s34 = sphi 0, %s31
      %s35 = sphi 0, %s32
      %s49 = sphi 0, %s51
      %s52 = sphi 0, %s49
      %s53 = sphi 0, %s52
      %s69 = sphi 0, %s53
      %s99 = sphi 0, %s101
      %s102 = sphi 0, %s99
      %s103 = sphi 0, %s102
      %s119 = sphi 0, %s103
      %s149 = sphi 0, %s151
      %s152 = sphi 0, %s149
      %s153 = sphi 0, %s152
      %s169 = sphi 0, %s153
      %s193 = sphi 0, %s195
      %s196 = sphi 0, %s193
      %s197 = sphi 0, %s196
      %s213 = sphi 0, %s197
      %s219 = sphi 0, %s221
      %s222 = sphi 0, %s219
      %s223 = sphi 0, %s222
      %s239 = sphi 0, %s223
    $region4: #{tiled_memory_moe.1} parent=1 // loop_header_branch
      %23 = sbr.rel (%p21) target = $region8
    $region5: #{tiled_memory_moe.1} parent=1 // loop_body
      %s25 = ssub.s32 %s20, 1
      %s26 = ssub.s32 %s20, 2
      %s36 = sadd.s32 1, %s29
      %p37 = scmp.ge.s32.totalorder %s36, 1
      %s38 = scalar_select %p37, 0, %s36
      %s39 = sadd.s32 1, %s28
      %s40 = scalar_select %p37, %s39, %s28
      %p41 = scmp.ge.s32.totalorder %s40, 5
      %s42 = scalar_select %p41, 0, %s40
      %s43 = sadd.s32 1, %s27
      %s44 = scalar_select %p41, %s43, %s27
      %p45 = scmp.ge.s32.totalorder %s44, 1
      %s46 = scalar_select %p45, 0, %s44
      %s47 = ssub.s32 %s27, %s46
      %p48 = scmp.eq.s32.totalorder %s47, 0
      %s50 = sadd.s32 %s49, 1
      %s51 = scalar_select %p48, %s49, %s50
      %p54 = pneg %p48
      %p55 = scmp.eq.s32.totalorder %s20, 4
      %p56 = por %p54, %p55
      %p57 = scmp.ne.s32.totalorder %s49, %s52
      %p58 = scmp.eq.s32.totalorder %s20, 0
      %p59 = por %p57, %p58
      %p60 = scmp.ne.s32.totalorder %s49, %s52
      %p61 = scmp.eq.s32.totalorder %s25, 4
      %p62 = por %p60, %p61
      %p63 = scmp.ne.s32.totalorder %s52, %s53
      %p64 = scmp.eq.s32.totalorder %s25, 0
      %p65 = por %p63, %p64
      %p66 = scmp.ne.s32.totalorder %s52, %s53
      %p67 = scmp.eq.s32.totalorder %s26, 4
      %p68 = por %p66, %p67
      %p70 = scmp.ne.s32.totalorder %s53, %s69
      %p71 = scmp.eq.s32.totalorder %s26, 0
      %p72 = por %p70, %p71
      %s73 = sld [smem:[#allocation5 + %s27]]
      %p74 = scmp.lt.s32.totalorder %s28, %s73
      %s75 = sshra.s32 %s28, 7
      %s76 = sand.u32 %s28, 127
      %s77 = sadd.s32 %s75, %s27
      %s78 = smul.u32 %s77, 128
      %s79 = sshra.s32 %s28, 7
      %s80 = sand.u32 %s28, 127
      %s81 = sadd.s32 %s78, %s80
      %s82 = sld [smem:[#allocation4 + %s81]]
      %s83 = scalar_select %p74, %s29, 0
      %s84 = sld [smem:[#allocation5 + %s46]]
      %p85 = scmp.lt.s32.totalorder %s42, %s84
      %s86 = sshra.s32 %s42, 7
      %s87 = sand.u32 %s42, 127
      %s88 = sadd.s32 %s86, %s46
      %s89 = smul.u32 %s88, 128
      %s90 = sshra.s32 %s42, 7
      %s91 = sand.u32 %s42, 127
      %s92 = sadd.s32 %s89, %s91
      %s93 = sld [smem:[#allocation4 + %s92]]
      %s94 = scalar_select %p85, %s38, 0
      %s95 = ssub.s32 %s82, %s93
      %s96 = ssub.s32 %s83, %s94
      %s97 = sor.u32 %s95, %s96
      %p98 = scmp.eq.s32.totalorder %s97, 0
      %s100 = sadd.s32 %s99, 1
      %s101 = scalar_select %p98, %s99, %s100
      %p104 = pneg %p98
      %p105 = scmp.eq.s32.totalorder %s20, 4
      %p106 = por %p104, %p105
      %p107 = scmp.ne.s32.totalorder %s99, %s102
      %p108 = scmp.eq.s32.totalorder %s20, 0
      %p109 = por %p107, %p108
      %p110 = scmp.ne.s32.totalorder %s99, %s102
      %p111 = scmp.eq.s32.totalorder %s25, 4
      %p112 = por %p110, %p111
      %p113 = scmp.ne.s32.totalorder %s102, %s103
      %p114 = scmp.eq.s32.totalorder %s25, 0
      %p115 = por %p113, %p114
      %p116 = scmp.ne.s32.totalorder %s102, %s103
      %p117 = scmp.eq.s32.totalorder %s26, 4
      %p118 = por %p116, %p117
      %p120 = scmp.ne.s32.totalorder %s103, %s119
      %p121 = scmp.eq.s32.totalorder %s26, 0
      %p122 = por %p120, %p121
      %s123 = sld [smem:[#allocation5 + %s27]]
      %p124 = scmp.lt.s32.totalorder %s28, %s123
      %s125 = sshra.s32 %s28, 7
      %s126 = sand.u32 %s28, 127
      %s127 = sadd.s32 %s125, %s27
      %s128 = smul.u32 %s127, 128
      %s129 = sshra.s32 %s28, 7
      %s130 = sand.u32 %s28, 127
      %s131 = sadd.s32 %s128, %s130
      %s132 = sld [smem:[#allocation4 + %s131]]
      %s133 = scalar_select %p124, %s29, 0
      %s134 = sld [smem:[#allocation5 + %s46]]
      %p135 = scmp.lt.s32.totalorder %s42, %s134
      %s136 = sshra.s32 %s42, 7
      %s137 = sand.u32 %s42, 127
      %s138 = sadd.s32 %s136, %s46
      %s139 = smul.u32 %s138, 128
      %s140 = sshra.s32 %s42, 7
      %s141 = sand.u32 %s42, 127
      %s142 = sadd.s32 %s139, %s141
      %s143 = sld [smem:[#allocation4 + %s142]]
      %s144 = scalar_select %p135, %s38, 0
      %s145 = ssub.s32 %s132, %s143
      %s146 = ssub.s32 %s133, %s144
      %s147 = sor.u32 %s145, %s146
      %p148 = scmp.eq.s32.totalorder %s147, 0
      %s150 = sadd.s32 %s149, 1
      %s151 = scalar_select %p148, %s149, %s150
      %p154 = pneg %p148
      %p155 = scmp.eq.s32.totalorder %s20, 4
      %p156 = por %p154, %p155
      %p157 = scmp.ne.s32.totalorder %s149, %s152
      %p158 = scmp.eq.s32.totalorder %s20, 0
      %p159 = por %p157, %p158
      %p160 = scmp.ne.s32.totalorder %s149, %s152
      %p161 = scmp.eq.s32.totalorder %s25, 4
      %p162 = por %p160, %p161
      %p163 = scmp.ne.s32.totalorder %s152, %s153
      %p164 = scmp.eq.s32.totalorder %s25, 0
      %p165 = por %p163, %p164
      %p166 = scmp.ne.s32.totalorder %s152, %s153
      %p167 = scmp.eq.s32.totalorder %s26, 4
      %p168 = por %p166, %p167
      %p170 = scmp.ne.s32.totalorder %s153, %s169
      %p171 = scmp.eq.s32.totalorder %s26, 0
      %p172 = por %p170, %p171
      %s173 = sshra.s32 %s28, 7
      %s174 = sand.u32 %s28, 127
      %s175 = sadd.s32 %s173, %s27
      %s176 = smul.u32 %s175, 128
      %s177 = sshra.s32 %s28, 7
      %s178 = sand.u32 %s28, 127
      %s179 = sadd.s32 %s176, %s178
      %s180 = sld [smem:[#allocation4 + %s179]]
      %s181 = sshra.s32 %s42, 7
      %s182 = sand.u32 %s42, 127
      %s183 = sadd.s32 %s181, %s46
      %s184 = smul.u32 %s183, 128
      %s185 = sshra.s32 %s42, 7
      %s186 = sand.u32 %s42, 127
      %s187 = sadd.s32 %s184, %s186
      %s188 = sld [smem:[#allocation4 + %s187]]
      %s189 = ssub.s32 %s180, %s188
      %s190 = ssub.s32 %s27, %s46
      %s191 = sor.u32 %s189, %s190
      %p192 = scmp.eq.s32.totalorder %s191, 0
      %s194 = sadd.s32 %s193, 1
      %s195 = scalar_select %p192, %s193, %s194
      %p198 = pneg %p192
      %p199 = scmp.eq.s32.totalorder %s20, 4
      %p200 = por %p198, %p199
      %p201 = scmp.ne.s32.totalorder %s193, %s196
      %p202 = scmp.eq.s32.totalorder %s20, 0
      %p203 = por %p201, %p202
      %p204 = scmp.ne.s32.totalorder %s193, %s196
      %p205 = scmp.eq.s32.totalorder %s25, 4
      %p206 = por %p204, %p205
      %p207 = scmp.ne.s32.totalorder %s196, %s197
      %p208 = scmp.eq.s32.totalorder %s25, 0
      %p209 = por %p207, %p208
      %p210 = scmp.ne.s32.totalorder %s196, %s197
      %p211 = scmp.eq.s32.totalorder %s26, 4
      %p212 = por %p210, %p211
      %p214 = scmp.ne.s32.totalorder %s197, %s213
      %p215 = scmp.eq.s32.totalorder %s26, 0
      %p216 = por %p214, %p215
      %s217 = ssub.s32 %s27, %s46
      %p218 = scmp.eq.s32.totalorder %s217, 0
      %s220 = sadd.s32 %s219, 1
      %s221 = scalar_select %p218, %s219, %s220
      %p224 = pneg %p218
      %p225 = scmp.eq.s32.totalorder %s20, 4
      %p226 = por %p224, %p225
      %p227 = scmp.ne.s32.totalorder %s219, %s222
      %p228 = scmp.eq.s32.totalorder %s20, 0
      %p229 = por %p227, %p228
      %p230 = scmp.ne.s32.totalorder %s219, %s222
      %p231 = scmp.eq.s32.totalorder %s25, 4
      %p232 = por %p230, %p231
      %p233 = scmp.ne.s32.totalorder %s222, %s223
      %p234 = scmp.eq.s32.totalorder %s25, 0
      %p235 = por %p233, %p234
      %p236 = scmp.ne.s32.totalorder %s222, %s223
      %p237 = scmp.eq.s32.totalorder %s26, 4
      %p238 = por %p236, %p237
      %p240 = scmp.ne.s32.totalorder %s223, %s239
      %p241 = scmp.eq.s32.totalorder %s26, 0
      %p242 = por %p240, %p241
      %p243 = scmp.le.s32.totalorder 1, %s20
      %p244 = scmp.lt.s32.totalorder %s20, 6
      %p245 = pnand %p243, %p244
      %p246 = pneg %p245
      // Predicated region
      $region9: #{tiled_memory_moe.1} parent=5 // pred_check
        _
      $region10: #{tiled_memory_moe.1} parent=5 // pred_check_branch
        %248 = sbr.rel (%p245) target = $region12
      $region11: #{tiled_memory_moe.1} parent=5 // pred_region
        %s249 = ssub.s32 %s20, 1
        // Predicated region
        $region13: #{tiled_memory_moe.1} parent=11 // pred_check
          %p250 = pneg %p65
        $region14: #{tiled_memory_moe.1} parent=11 // pred_check_branch
          %252 = sbr.rel (%p250) target = $region16
        $region15: #{tiled_memory_moe.1} parent=11 // pred_region
          %s253 = smul.u32 2, %s30
          %p254 = scmp.lt.s32.totalorder %s253, 1
          %s255 = scalar_select %p254, %s253, 1
          %s256 = smul.addr %s255, 4
          %s257 = scalar_lea.vmem %s2, %s256
          %s258 = smul.u32 2, %s30
        $region16: #{tiled_memory_moe.1} parent=11 // pred_fallthru
          _
      $region12: #{tiled_memory_moe.1} parent=5 // pred_fallthru
        _
      %p259 = scmp.lt.s32.totalorder %s20, 5
      // Predicated region
      $region17: #{tiled_memory_moe.1} parent=5 // pred_check
        %p260 = pneg %p259
      $region18: #{tiled_memory_moe.1} parent=5 // pred_check_branch
        %262 = sbr.rel (%p260) target = $region20
      $region19: #{tiled_memory_moe.1} parent=5 // pred_region
        // Predicated region
        $region21: #{tiled_memory_moe.1} parent=19 // pred_check
          %p263 = pneg %p109
        $region22: #{tiled_memory_moe.1} parent=19 // pred_check_branch
          %265 = sbr.rel (%p263) target = $region24
        $region23: #{tiled_memory_moe.1} parent=19 // pred_region
          %s266 = sld [smem:[#allocation5 + %s27]]
          %p267 = scmp.lt.s32.totalorder %s28, %s266
          %s268 = sshra.s32 %s28, 7
          %s269 = sand.u32 %s28, 127
          %s270 = sadd.s32 %s268, %s27
          %s271 = smul.u32 %s270, 128
          %s272 = sshra.s32 %s28, 7
          %s273 = sand.u32 %s28, 127
          %s274 = sadd.s32 %s271, %s273
          %s275 = sld [smem:[#allocation4 + %s274]]
          %s276 = scalar_select %p267, %s29, 0
          %p277 = scmp.lt.s32.totalorder %s275, 4
          %s278 = scalar_select %p277, %s275, 4
          %p279 = scmp.lt.s32.totalorder %s276, 0
          %s280 = scalar_select %p279, %s276, 0
          %s281 = smul.addr %s278, 8
          %s282 = sadd.s32 %s280, %s281
          %s283 = smul.addr %s282, 4
          %s284 = scalar_lea.vmem %s3, %s283
          %s285 = sld [smem:[#allocation5 + %s27]]
          %p286 = scmp.lt.s32.totalorder %s28, %s285
          %s287 = sshra.s32 %s28, 7
          %s288 = sand.u32 %s28, 127
          %s289 = sadd.s32 %s287, %s27
          %s290 = smul.u32 %s289, 128
          %s291 = sshra.s32 %s28, 7
          %s292 = sand.u32 %s28, 127
          %s293 = sadd.s32 %s290, %s292
          %s294 = sld [smem:[#allocation4 + %s293]]
          %s295 = scalar_select %p286, %s29, 0
        $region24: #{tiled_memory_moe.1} parent=19 // pred_fallthru
          _
        // Predicated region
        $region25: #{tiled_memory_moe.1} parent=19 // pred_check
          %p296 = pneg %p159
        $region26: #{tiled_memory_moe.1} parent=19 // pred_check_branch
          %298 = sbr.rel (%p296) target = $region28
        $region27: #{tiled_memory_moe.1} parent=19 // pred_region
          %s299 = sld [smem:[#allocation5 + %s27]]
          %p300 = scmp.lt.s32.totalorder %s28, %s299
          %s301 = sshra.s32 %s28, 7
          %s302 = sand.u32 %s28, 127
          %s303 = sadd.s32 %s301, %s27
          %s304 = smul.u32 %s303, 128
          %s305 = sshra.s32 %s28, 7
          %s306 = sand.u32 %s28, 127
          %s307 = sadd.s32 %s304, %s306
          %s308 = sld [smem:[#allocation4 + %s307]]
          %s309 = scalar_select %p300, %s29, 0
          %s310 = smul.u32 8, %s309
          %p311 = scmp.lt.s32.totalorder %s308, 4
          %s312 = scalar_select %p311, %s308, 4
          %p313 = scmp.lt.s32.totalorder %s310, 7
          %s314 = scalar_select %p313, %s310, 7
          %s315 = smul.addr %s312, 8
          %s316 = sadd.s32 %s314, %s315
          %s317 = smul.addr %s316, 4
          %s318 = scalar_lea.vmem %s4, %s317
          %s319 = sld [smem:[#allocation5 + %s27]]
          %p320 = scmp.lt.s32.totalorder %s28, %s319
          %s321 = sshra.s32 %s28, 7
          %s322 = sand.u32 %s28, 127
          %s323 = sadd.s32 %s321, %s27
          %s324 = smul.u32 %s323, 128
          %s325 = sshra.s32 %s28, 7
          %s326 = sand.u32 %s28, 127
          %s327 = sadd.s32 %s324, %s326
          %s328 = sld [smem:[#allocation4 + %s327]]
          %s329 = scalar_select %p320, %s29, 0
          %s330 = smul.u32 8, %s329
        $region28: #{tiled_memory_moe.1} parent=19 // pred_fallthru
          _
        // Predicated region
        $region29: #{tiled_memory_moe.1} parent=19 // pred_check
          %p331 = pneg %p203
        $region30: #{tiled_memory_moe.1} parent=19 // pred_check_branch
          %333 = sbr.rel (%p331) target = $region32
        $region31: #{tiled_memory_moe.1} parent=19 // pred_region
          %s334 = sshra.s32 %s28, 7
          %s335 = sand.u32 %s28, 127
          %s336 = sadd.s32 %s334, %s27
          %s337 = smul.u32 %s336, 128
          %s338 = sshra.s32 %s28, 7
          %s339 = sand.u32 %s28, 127
          %s340 = sadd.s32 %s337, %s339
          %s341 = sld [smem:[#allocation4 + %s340]]
          %s342 = smul.u32 2, %s27
          %p343 = scmp.lt.s32.totalorder %s341, 4
          %s344 = scalar_select %p343, %s341, 4
          %p345 = scmp.lt.s32.totalorder %s342, 1
          %s346 = scalar_select %p345, %s342, 1
          %s347 = smul.addr %s344, 2
          %s348 = sadd.s32 %s346, %s347
          %s349 = smul.addr %s348, 8
          %s350 = scalar_lea.vmem %s5, %s349
          %s351 = sshra.s32 %s28, 7
          %s352 = sand.u32 %s28, 127
          %s353 = sadd.s32 %s351, %s27
          %s354 = smul.u32 %s353, 128
          %s355 = sshra.s32 %s28, 7
          %s356 = sand.u32 %s28, 127
          %s357 = sadd.s32 %s354, %s356
          %s358 = sld [smem:[#allocation4 + %s357]]
          %s359 = smul.u32 2, %s27
        $region32: #{tiled_memory_moe.1} parent=19 // pred_fallthru
          _
      $region20: #{tiled_memory_moe.1} parent=5 // pred_fallthru
        _
      %p360 = scmp.le.s32.totalorder 1, %s20
      %p361 = scmp.lt.s32.totalorder %s20, 6
      %p362 = pnand %p360, %p361
      %p363 = pneg %p362
      // Predicated region
      $region33: #{tiled_memory_moe.1} parent=5 // pred_check
        _
      $region34: #{tiled_memory_moe.1} parent=5 // pred_check_branch
        %365 = sbr.rel (%p362) target = $region36
      $region35: #{tiled_memory_moe.1} parent=5 // pred_region
        %s366 = ssub.s32 %s20, 1
        %s367 = smul.u32 2, %s30
        %p368 = scmp.lt.s32.totalorder %s367, 1
        %s369 = scalar_select %p368, %s367, 1
        %s370 = smul.addr %s369, 4
        %s371 = scalar_lea.vmem %s2, %s370
        %p372 = pneg %p65
        %p373 = pneg %p62
        %s374 = sld [smem:[#allocation5 + %s30]]
        %p375 = scmp.lt.s32.totalorder %s31, %s374
        %s376 = sshra.s32 %s31, 7
        %s377 = sand.u32 %s31, 127
        %s378 = sadd.s32 %s376, %s30
        %s379 = smul.u32 %s378, 128
        %s380 = sshra.s32 %s31, 7
        %s381 = sand.u32 %s31, 127
        %s382 = sadd.s32 %s379, %s381
        %s383 = sld [smem:[#allocation4 + %s382]]
        %s384 = scalar_select %p375, %s32, 0
        %p385 = scmp.lt.s32.totalorder %s383, 4
        %s386 = scalar_select %p385, %s383, 4
        %p387 = scmp.lt.s32.totalorder %s384, 0
        %s388 = scalar_select %p387, %s384, 0
        %s389 = smul.addr %s386, 8
        %s390 = sadd.s32 %s388, %s389
        %s391 = smul.addr %s390, 4
        %s392 = scalar_lea.vmem %s3, %s391
        %p393 = pneg %p115
        %p394 = pneg %p112
        %s395 = sld [smem:[#allocation5 + %s30]]
        %p396 = scmp.lt.s32.totalorder %s31, %s395
        %s397 = sshra.s32 %s31, 7
        %s398 = sand.u32 %s31, 127
        %s399 = sadd.s32 %s397, %s30
        %s400 = smul.u32 %s399, 128
        %s401 = sshra.s32 %s31, 7
        %s402 = sand.u32 %s31, 127
        %s403 = sadd.s32 %s400, %s402
        %s404 = sld [smem:[#allocation4 + %s403]]
        %s405 = scalar_select %p396, %s32, 0
        %s406 = smul.u32 8, %s405
        %p407 = scmp.lt.s32.totalorder %s404, 4
        %s408 = scalar_select %p407, %s404, 4
        %p409 = scmp.lt.s32.totalorder %s406, 7
        %s410 = scalar_select %p409, %s406, 7
        %s411 = smul.addr %s408, 8
        %s412 = sadd.s32 %s410, %s411
        %s413 = smul.addr %s412, 4
        %s414 = scalar_lea.vmem %s4, %s413
        %p415 = pneg %p165
        %p416 = pneg %p162
        %s417 = sshra.s32 %s31, 7
        %s418 = sand.u32 %s31, 127
        %s419 = sadd.s32 %s417, %s30
        %s420 = smul.u32 %s419, 128
        %s421 = sshra.s32 %s31, 7
        %s422 = sand.u32 %s31, 127
        %s423 = sadd.s32 %s420, %s422
        %s424 = sld [smem:[#allocation4 + %s423]]
        %s425 = smul.u32 2, %s30
        %p426 = scmp.lt.s32.totalorder %s424, 4
        %s427 = scalar_select %p426, %s424, 4
        %p428 = scmp.lt.s32.totalorder %s425, 1
        %s429 = scalar_select %p428, %s425, 1
        %s430 = smul.addr %s427, 2
        %s431 = sadd.s32 %s429, %s430
        %s432 = smul.addr %s431, 8
        %s433 = scalar_lea.vmem %s5, %s432
        %p434 = pneg %p209
        %p435 = pneg %p206
        %p436 = pneg %p235
        %p437 = pneg %p232
        %s438 = smul.u32 2, %s30
        %p439 = scmp.lt.s32.totalorder %s438, 1
        %s440 = scalar_select %p439, %s438, 1
        %s441 = smul.addr %s440, 4
        %s442 = scalar_lea.vmem %s2, %s441
        %s443 = smul.u32 2, %s30
        %s444 = sld [smem:[#allocation5 + %s30]]
        %p445 = scmp.lt.s32.totalorder %s31, %s444
        %s446 = sshra.s32 %s31, 7
        %s447 = sand.u32 %s31, 127
        %s448 = sadd.s32 %s446, %s30
        %s449 = smul.u32 %s448, 128
        %s450 = sshra.s32 %s31, 7
        %s451 = sand.u32 %s31, 127
        %s452 = sadd.s32 %s449, %s451
        %s453 = sld [smem:[#allocation4 + %s452]]
        %s454 = scalar_select %p445, %s32, 0
        %p455 = scmp.lt.s32.totalorder %s453, 4
        %s456 = scalar_select %p455, %s453, 4
        %p457 = scmp.lt.s32.totalorder %s454, 0
        %s458 = scalar_select %p457, %s454, 0
        %s459 = smul.addr %s456, 8
        %s460 = sadd.s32 %s458, %s459
        %s461 = smul.addr %s460, 4
        %s462 = scalar_lea.vmem %s3, %s461
        %s463 = sld [smem:[#allocation5 + %s30]]
        %p464 = scmp.lt.s32.totalorder %s31, %s463
        %s465 = sshra.s32 %s31, 7
        %s466 = sand.u32 %s31, 127
        %s467 = sadd.s32 %s465, %s30
        %s468 = smul.u32 %s467, 128
        %s469 = sshra.s32 %s31, 7
        %s470 = sand.u32 %s31, 127
        %s471 = sadd.s32 %s468, %s470
        %s472 = sld [smem:[#allocation4 + %s471]]
        %s473 = scalar_select %p464, %s32, 0
        %s474 = sld [smem:[#allocation5 + %s30]]
        %p475 = scmp.lt.s32.totalorder %s31, %s474
        %s476 = sshra.s32 %s31, 7
        %s477 = sand.u32 %s31, 127
        %s478 = sadd.s32 %s476, %s30
        %s479 = smul.u32 %s478, 128
        %s480 = sshra.s32 %s31, 7
        %s481 = sand.u32 %s31, 127
        %s482 = sadd.s32 %s479, %s481
        %s483 = sld [smem:[#allocation4 + %s482]]
        %s484 = scalar_select %p475, %s32, 0
        %s485 = smul.u32 8, %s484
        %p486 = scmp.lt.s32.totalorder %s483, 4
        %s487 = scalar_select %p486, %s483, 4
        %p488 = scmp.lt.s32.totalorder %s485, 7
        %s489 = scalar_select %p488, %s485, 7
        %s490 = smul.addr %s487, 8
        %s491 = sadd.s32 %s489, %s490
        %s492 = smul.addr %s491, 4
        %s493 = scalar_lea.vmem %s4, %s492
        %s494 = sld [smem:[#allocation5 + %s30]]
        %p495 = scmp.lt.s32.totalorder %s31, %s494
        %s496 = sshra.s32 %s31, 7
        %s497 = sand.u32 %s31, 127
        %s498 = sadd.s32 %s496, %s30
        %s499 = smul.u32 %s498, 128
        %s500 = sshra.s32 %s31, 7
        %s501 = sand.u32 %s31, 127
        %s502 = sadd.s32 %s499, %s501
        %s503 = sld [smem:[#allocation4 + %s502]]
        %s504 = scalar_select %p495, %s32, 0
        %s505 = smul.u32 8, %s504
        %s506 = sshra.s32 %s31, 7
        %s507 = sand.u32 %s31, 127
        %s508 = sadd.s32 %s506, %s30
        %s509 = smul.u32 %s508, 128
        %s510 = sshra.s32 %s31, 7
        %s511 = sand.u32 %s31, 127
        %s512 = sadd.s32 %s509, %s511
        %s513 = sld [smem:[#allocation4 + %s512]]
        %s514 = smul.u32 2, %s30
        %p515 = scmp.lt.s32.totalorder %s513, 4
        %s516 = scalar_select %p515, %s513, 4
        %p517 = scmp.lt.s32.totalorder %s514, 1
        %s518 = scalar_select %p517, %s514, 1
        %s519 = smul.addr %s516, 2
        %s520 = sadd.s32 %s518, %s519
        %s521 = smul.addr %s520, 8
        %s522 = scalar_lea.vmem %s5, %s521
        %s523 = sshra.s32 %s31, 7
        %s524 = sand.u32 %s31, 127
        %s525 = sadd.s32 %s523, %s30
        %s526 = smul.u32 %s525, 128
        %s527 = sshra.s32 %s31, 7
        %s528 = sand.u32 %s31, 127
        %s529 = sadd.s32 %s526, %s528
        %s530 = sld [smem:[#allocation4 + %s529]]
        %s531 = smul.u32 2, %s30
        %s532 = smul.u32 2, %s30
        %p534 = scmp.eq.s32.totalorder %s31, 0
        %p535 = scmp.eq.s32.totalorder %s32, 0
        %p536 = pnand %p534, %p535
        %p537 = pneg %p536
        // Predicated region
        $region37: #{tiled_memory_moe.1} parent=35 // pred_check
          _
        $region38: #{tiled_memory_moe.1} parent=35 // pred_check_branch
          %539 = sbr.rel (%p536) target = $region40
        $region39: #{tiled_memory_moe.1} parent=35 // pred_region
          %vm540 = vcmask 261120
          %541 = vst.msk [vmem:[#allocation2] sm:$0xff] %vm540, 0.0
          %542 = vst.msk [vmem:[#allocation2 + $0x8] sm:$0xff] %vm540, 0.0
        $region40: #{tiled_memory_moe.1} parent=35 // pred_fallthru
          _
        %s543 = sld [smem:[#allocation5 + %s30]]
        %p544 = scmp.lt.s32.totalorder %s31, %s543
        // Predicated region
        $region41: #{tiled_memory_moe.1} parent=35 // pred_check
          %p545 = pneg %p544
        $region42: #{tiled_memory_moe.1} parent=35 // pred_check_branch
          %547 = sbr.rel (%p545) target = $region44
        $region43: #{tiled_memory_moe.1} parent=35 // pred_region
          %v548 = vld [vmem:[%s442] sm:$0xf]
          %v549 = vld [vmem:[%s442 + $0x4] sm:$0xf]
          %v550 = vld [vmem:[%s462] sm:$0xf]
          %v551 = vld [vmem:[%s462 + $0x4] sm:$0xf]
          %v552 = vld [vmem:[%s462 + $0x8] sm:$0xf]
          %v553 = vld [vmem:[%s462 + $0xc] sm:$0xf]
          %v556 = vunpack.c.l.b16 %v548
          %v557 = vunpack.c.l.b16 %v549
          %v558 = vpack.c.b16 %v557, %v556
          %v563 = vunpack.c.l.b16 %v550
          %v564 = vunpack.c.l.b16 %v551
          %v565 = vunpack.c.l.b16 %v552
          %v566 = vunpack.c.l.b16 %v553
          %v567 = vpack.c.b16 %v564, %v563
          %v568 = vpack.c.b16 %v566, %v565
          %vm571 = vcmask 261120
          %v573 = vsel %vm571, %v558, 0
          %575 = vmatprep.subr.bf16.mxu0 0
          %576 = vmatpush1.bf16.msra.mxu0 0
          %577 = vmatprep.subr.bf16.mxu0 0
          %578 = vmatpush1.bf16.msra.mxu0 0
          %579 = vmatprep.subr.bf16.mxu0 0
          %580 = vmatpush1.bf16.msra.mxu0 0
          %581 = vmatprep.subr.bf16.mxu0 0
          %582 = vmatpush1.bf16.msra.mxu0 0
          %583 = vmatprep.subr.bf16.mxu0 0
          %584 = vmatpush1.bf16.msra.mxu0 0
          %585 = vmatprep.subr.bf16.mxu0 0
          %586 = vmatpush1.bf16.msra.mxu0 0
          %587 = vmatprep.subr.bf16.mxu0 0
          %588 = vmatpush1.bf16.msra.mxu0 %v568
          %589 = vmatprep.subr.bf16.mxu0 0
          %590 = vmatpush1.bf16.msra.mxu0 %v567
          %591 = vmatprep.subr.bf16.mxu0 0
          %592 = vmatpush2.bf16.msra.mxu0 0
          %593 = vmatprep.subr.bf16.mxu0 0
          %594 = vmatpush2.bf16.msra.mxu0 0
          %595 = vmatprep.subr.bf16.mxu0 0
          %596 = vmatpush2.bf16.msra.mxu0 0
          %597 = vmatprep.subr.bf16.mxu0 0
          %598 = vmatpush2.bf16.msra.mxu0 0
          %599 = vmatprep.subr.bf16.mxu0 0
          %600 = vmatpush2.bf16.msra.mxu0 0
          %601 = vmatprep.subr.bf16.mxu0 0
          %602 = vmatpush2.bf16.msra.mxu0 0
          %603 = vmatprep.subr.bf16.mxu0 0
          %604 = vmatpush2.bf16.msra.mxu0 0
          %605 = vmatprep.subr.bf16.mxu0 0
          %606 = vmatpush2.bf16.msra.mxu0 0
          %607 = vmatprep.mubr.bf16.mxu0 0
          %608 = vmatmul.mubr.bf16.gmra.mxu0 %v573
          %v609 = vpop.f32.mrf.mxu0
          %v610 = vadd.f32 0.0, %v609
          %v611 = vpop.f32.mrf.mxu0
          %v612 = vpop.f32.mrf.mxu0
          %v613 = vadd.f32 0.0, %v612
          %v614 = vpop.f32.mrf.mxu0
          %615 = vdwg.mxu0
          %s616 = scalar_lea.vmem %s462, 16
          %v617 = vld [vmem:[%s616] sm:$0xf]
          %v618 = vld [vmem:[%s616 + $0x4] sm:$0xf]
          %v619 = vld [vmem:[%s616 + $0x8] sm:$0xf]
          %v620 = vld [vmem:[%s616 + $0xc] sm:$0xf]
          %v625 = vunpack.c.l.b16 %v617
          %v626 = vunpack.c.l.b16 %v618
          %v627 = vunpack.c.l.b16 %v619
          %v628 = vunpack.c.l.b16 %v620
          %v629 = vpack.c.b16 %v626, %v625
          %v630 = vpack.c.b16 %v628, %v627
          %633 = vmatprep.subr.bf16.mxu0 0
          %634 = vmatpush1.bf16.msra.mxu0 0
          %635 = vmatprep.subr.bf16.mxu0 0
          %636 = vmatpush1.bf16.msra.mxu0 0
          %637 = vmatprep.subr.bf16.mxu0 0
          %638 = vmatpush1.bf16.msra.mxu0 0
          %639 = vmatprep.subr.bf16.mxu0 0
          %640 = vmatpush1.bf16.msra.mxu0 0
          %641 = vmatprep.subr.bf16.mxu0 0
          %642 = vmatpush1.bf16.msra.mxu0 0
          %643 = vmatprep.subr.bf16.mxu0 0
          %644 = vmatpush1.bf16.msra.mxu0 0
          %645 = vmatprep.subr.bf16.mxu0 0
          %646 = vmatpush1.bf16.msra.mxu0 %v630
          %647 = vmatprep.subr.bf16.mxu0 0
          %648 = vmatpush1.bf16.msra.mxu0 %v629
          %649 = vmatprep.subr.bf16.mxu0 0
          %650 = vmatpush2.bf16.msra.mxu0 0
          %651 = vmatprep.subr.bf16.mxu0 0
          %652 = vmatpush2.bf16.msra.mxu0 0
          %653 = vmatprep.subr.bf16.mxu0 0
          %654 = vmatpush2.bf16.msra.mxu0 0
          %655 = vmatprep.subr.bf16.mxu0 0
          %656 = vmatpush2.bf16.msra.mxu0 0
          %657 = vmatprep.subr.bf16.mxu0 0
          %658 = vmatpush2.bf16.msra.mxu0 0
          %659 = vmatprep.subr.bf16.mxu0 0
          %660 = vmatpush2.bf16.msra.mxu0 0
          %661 = vmatprep.subr.bf16.mxu0 0
          %662 = vmatpush2.bf16.msra.mxu0 0
          %663 = vmatprep.subr.bf16.mxu0 0
          %664 = vmatpush2.bf16.msra.mxu0 0
          %665 = vmatprep.mubr.bf16.mxu0 0
          %666 = vmatmul.mubr.bf16.gmra.mxu0 %v573
          %v667 = vpop.f32.mrf.mxu0
          %v668 = vadd.f32 0.0, %v667
          %v669 = vpop.f32.mrf.mxu0
          %v670 = vpop.f32.mrf.mxu0
          %v671 = vadd.f32 0.0, %v670
          %v672 = vpop.f32.mrf.mxu0
          %673 = vdwg.mxu0
          %v674 = vld [vmem:[%s522] sm:$0xff]
          %v675 = vld [vmem:[%s522 + $0x8] sm:$0xff]
          %v676 = vxor.u32 %v610, 2147483648
          %v677 = vxor.u32 %v613, 2147483648
          %v678 = vmul.f32 %v676, 1.442695
          %v679 = vpow.pop %v678
          %v680 = vmul.f32 %v677, 1.442695
          %v681 = vpow.pop %v680
          %v682 = vadd.f32 %v679, 1.0
          %v683 = vadd.f32 %v681, 1.0
          %v684 = vrcp.pop %v682
          %v685 = vmul.f32 1.0, %v684
          %v686 = vrcp.pop %v683
          %v687 = vmul.f32 1.0, %v686
          %v688 = vmul.f32 %v610, %v685
          %v689 = vmul.f32 %v613, %v687
          %v690 = vmul.f32 %v688, %v668
          %v691 = vmul.f32 %v689, %v671
          %693 = vset.pattern.permute.xlu0 0
          %694 = vperm.xlu0 %693, %v674
          %v695 = vpop.permute.xlu0 %694
          %698 = vset.pattern.permute.xlu0 0
          %699 = vperm.xlu0 %698, %v675
          %v700 = vpop.permute.xlu0 %699
          %v702 = vmul.f32 %v695, %v690
          %v703 = vmul.f32 %v700, %v691
          %v704 = vpack.c.bf16 %v703, %v702
          %v705 = vld [vmem:[#allocation2] sm:$0xff]
          %v706 = vld [vmem:[#allocation2 + $0x8] sm:$0xff]
          %v707 = vld [vmem:[%s493] sm:$0xf]
          %v708 = vld [vmem:[%s493 + $0x4] sm:$0xf]
          %v709 = vld [vmem:[%s493 + $0x8] sm:$0xf]
          %v710 = vld [vmem:[%s493 + $0xc] sm:$0xf]
          %v711 = vld [vmem:[%s493 + $0x10] sm:$0xf]
          %v712 = vld [vmem:[%s493 + $0x14] sm:$0xf]
          %v713 = vld [vmem:[%s493 + $0x18] sm:$0xf]
          %v714 = vld [vmem:[%s493 + $0x1c] sm:$0xf]
          %v723 = vunpack.c.l.b16 %v707
          %v724 = vunpack.c.l.b16 %v708
          %v725 = vunpack.c.l.b16 %v709
          %v726 = vunpack.c.l.b16 %v710
          %v727 = vunpack.c.l.b16 %v711
          %v728 = vunpack.c.l.b16 %v712
          %v729 = vunpack.c.l.b16 %v713
          %v730 = vunpack.c.l.b16 %v714
          %v731 = vpack.c.b16 %v724, %v723
          %v732 = vpack.c.b16 %v726, %v725
          %v733 = vpack.c.b16 %v728, %v727
          %v734 = vpack.c.b16 %v730, %v729
          %vm739 = vcmask 523264
          %v741 = vsel %vm739, %v704, 0
          %743 = vmatprep.subr.bf16.mxu0 0
          %744 = vmatpush1.bf16.msra.mxu0 0
          %745 = vmatprep.subr.bf16.mxu0 0
          %746 = vmatpush1.bf16.msra.mxu0 0
          %747 = vmatprep.subr.bf16.mxu0 0
          %748 = vmatpush1.bf16.msra.mxu0 0
          %749 = vmatprep.subr.bf16.mxu0 0
          %750 = vmatpush1.bf16.msra.mxu0 0
          %751 = vmatprep.subr.bf16.mxu0 0
          %752 = vmatpush1.bf16.msra.mxu0 %v734
          %753 = vmatprep.subr.bf16.mxu0 0
          %754 = vmatpush1.bf16.msra.mxu0 %v733
          %755 = vmatprep.subr.bf16.mxu0 0
          %756 = vmatpush1.bf16.msra.mxu0 %v732
          %757 = vmatprep.subr.bf16.mxu0 0
          %758 = vmatpush1.bf16.msra.mxu0 %v731
          %759 = vmatprep.subr.bf16.mxu0 0
          %760 = vmatpush2.bf16.msra.mxu0 0
          %761 = vmatprep.subr.bf16.mxu0 0
          %762 = vmatpush2.bf16.msra.mxu0 0
          %763 = vmatprep.subr.bf16.mxu0 0
          %764 = vmatpush2.bf16.msra.mxu0 0
          %765 = vmatprep.subr.bf16.mxu0 0
          %766 = vmatpush2.bf16.msra.mxu0 0
          %767 = vmatprep.subr.bf16.mxu0 0
          %768 = vmatpush2.bf16.msra.mxu0 0
          %769 = vmatprep.subr.bf16.mxu0 0
          %770 = vmatpush2.bf16.msra.mxu0 0
          %771 = vmatprep.subr.bf16.mxu0 0
          %772 = vmatpush2.bf16.msra.mxu0 0
          %773 = vmatprep.subr.bf16.mxu0 0
          %774 = vmatpush2.bf16.msra.mxu0 0
          %775 = vmatprep.mubr.bf16.mxu0 0
          %776 = vmatmul.mubr.bf16.gmra.mxu0 %v741
          %v777 = vpop.f32.mrf.mxu0
          %v778 = vadd.f32 0.0, %v777
          %v779 = vpop.f32.mrf.mxu0
          %v780 = vpop.f32.mrf.mxu0
          %v781 = vadd.f32 0.0, %v780
          %v782 = vpop.f32.mrf.mxu0
          %783 = vdwg.mxu0
          %v784 = vadd.f32 %v705, %v778
          %v785 = vadd.f32 %v706, %v781
          %786 = vst.msk [vmem:[#allocation2] sm:$0xff] %vm571, %v784
          %787 = vst.msk [vmem:[#allocation2 + $0x8] sm:$0xff] %vm571, %v785
        $region44: #{tiled_memory_moe.1} parent=35 // pred_fallthru
          _
        %p788 = scmp.eq.s32.totalorder %s31, 4
        %p789 = pnand %p788, %p535
        %p790 = pneg %p789
        // Predicated region
        $region45: #{tiled_memory_moe.1} parent=35 // pred_check
          _
        $region46: #{tiled_memory_moe.1} parent=35 // pred_check_branch
          %792 = sbr.rel (%p789) target = $region48
        $region47: #{tiled_memory_moe.1} parent=35 // pred_region
          %v793 = vld [vmem:[#allocation2] sm:$0xff]
          %v794 = vld [vmem:[#allocation2 + $0x8] sm:$0xff]
          %vm795 = vcmask 261120
          %796 = vst.msk [vmem:[#allocation6] sm:$0xff] %vm795, %v793
          %797 = vst.msk [vmem:[#allocation6 + $0x8] sm:$0xff] %vm795, %v794
        $region48: #{tiled_memory_moe.1} parent=35 // pred_fallthru
          _
        // Predicated region
        $region49: #{tiled_memory_moe.1} parent=35 // pred_check
          %p798 = pneg %p232
        $region50: #{tiled_memory_moe.1} parent=35 // pred_check_branch
          %800 = sbr.rel (%p798) target = $region52
        $region51: #{tiled_memory_moe.1} parent=35 // pred_region
          %s801 = smul.u32 2, %s30
          %s803 = ssub.s32 256, 256
          %804 = vsyncadd [#allocation7], %s803
          %s805 = smul.addr %s801, 128
          %s806 = scalar_lea.hbm %s6, %s805
          %s807 = sshll.u32 [#allocation6], 4
          %s808 = int_to_ptr.vmem [resolvable:$true] %s807
          %813 = dma.vmem_to_hbm [thread:$0]  %s808, 256, %s806, [#allocation7], 128, 128, 8
        $region52: #{tiled_memory_moe.1} parent=35 // pred_fallthru
          _
        // Predicated region
        $region53: #{tiled_memory_moe.1} parent=35 // pred_check
          %p814 = pneg %p232
        $region54: #{tiled_memory_moe.1} parent=35 // pred_check_branch
          %816 = sbr.rel (%p814) target = $region56
        $region55: #{tiled_memory_moe.1} parent=35 // pred_region
          %817 = dma.done [#allocation7], 256
        $region56: #{tiled_memory_moe.1} parent=35 // pred_fallthru
          _
      $region36: #{tiled_memory_moe.1} parent=5 // pred_fallthru
        _
      %p818 = scmp.le.s32.totalorder 2, %s20
      // Predicated region
      $region57: #{tiled_memory_moe.1} parent=5 // pred_check
        %p819 = pneg %p818
      $region58: #{tiled_memory_moe.1} parent=5 // pred_check_branch
        %821 = sbr.rel (%p819) target = $region60
      $region59: #{tiled_memory_moe.1} parent=5 // pred_region
        %s822 = ssub.s32 %s20, 2
      $region60: #{tiled_memory_moe.1} parent=5 // pred_fallthru
        _
    $region6: #{tiled_memory_moe.1} parent=1 // loop_footer
      %s24 = sadd.s32 1, %s20
    $region7: #{tiled_memory_moe.1} parent=1 // loop_footer_branch
      %19 = sbr.rel target = $region3
    $region8: #{tiled_memory_moe.1} parent=1 // loop_exit
      _
    %823 = vsyncpa [#allocation7], 1
    %s824 = scalar_lea.sflag [#allocation7], 1
    %825 = vsyncpa %s824, 1

</llo_original>
